<compile_context>
chip_gen: v5e
topology: v5e:2x2
jax: 0.10.0
libtpu: 0.0.40
codegen_flags: <defaults>
</compile_context>

<pallas_src>
import functools
import math

import jax
import jax.numpy as jnp
from jax import lax
from jax.experimental import pallas as pl
from jax.experimental.pallas import tpu as pltpu

_LANE = 128
_SUBCHUNK_MIN = 256          # min hidden sub-chunk width (keeps fc2 contraction MXU-deep)
_SUBCHUNK_MAX = 1024         # bounds live f32 GELU intermediates to (tm, 1024)
_STEP_OVERHEAD_BYTES = 400_000   # ~0.35 us per grid step expressed as HBM-byte equivalents


def _gelu_exact(x):
    # nn.GELU() default = exact (erf-based) GELU, computed in f32.
    # TODO(synk): on v5e a tanh-approx GELU would move this to the otherwise-idle EUP;
    # TODO(synk): on v6e/v7x with bf16 inputs the bias-add + GELU could run in bf16.
    return 0.5 * x * (1.0 + lax.erf(x * 0.7071067811865476))


def _round_up(x, m):
    return ((x + m - 1) // m) * m


def _sublane(dtype):
    it = jnp.dtype(dtype).itemsize
    return 8 if it >= 4 else (16 if it == 2 else 32)


def _pad2(a, rows, cols):
    pr, pc = rows - a.shape[0], cols - a.shape[1]
    if pr == 0 and pc == 0:
        return a
    return jnp.pad(a, ((0, pr), (0, pc)))


def _vmem_budget():
    """Per-generation VMEM budget: ~70% of capacity as the planning target, ~85% as the
    explicit scoped-VMEM limit (v5e/v6e 128 MiB -> ~90/108 MiB, v7x 64 MiB -> ~45/54 MiB)."""
    cap = 64 * 1024 * 1024
    try:
        cap = int(pltpu.get_tpu_info().vmem_capacity_bytes)
    except Exception:  # conservative fallback if the query is unavailable on this build
        pass
    target = max(min(int(cap * 0.70), 96 * 1024 * 1024), 24 * 1024 * 1024)
    limit = max(min(int(cap * 0.85), 108 * 1024 * 1024), 32 * 1024 * 1024)
    return target, limit


_BUFFERED1_OK = None


def _buffered1_supported():
    """One-time cached probe: does this Pallas build accept pipeline_mode=pl.Buffered(1) on a
    grid-constant block?  Keeps the capability check out of the per-call hot path so real
    kernel compile errors are never swallowed by a fallback retry."""
    global _BUFFERED1_OK
    if _BUFFERED1_OK is None:
        try:
            def _probe(a_ref, c_ref, o_ref):
                o_ref[...] = a_ref[...] + c_ref[...]

            a = jnp.zeros((16, _LANE), jnp.float32)
            c = jnp.ones((8, _LANE), jnp.float32)
            out = pl.pallas_call(
                _probe,
                out_shape=jax.ShapeDtypeStruct((16, _LANE), jnp.float32),
                grid=(2,),
                in_specs=[
                    pl.BlockSpec((8, _LANE), lambda i: (i, 0)),
                    pl.BlockSpec((8, _LANE), lambda i: (0, 0),
                                 pipeline_mode=pl.Buffered(1)),
                ],
                out_specs=pl.BlockSpec((8, _LANE), lambda i: (i, 0)),
            )(a, c)
            _BUFFERED1_OK = bool(jnp.allclose(jax.block_until_ready(out), 1.0))
        except Exception:  # probe only; the real kernel never depends on this path
            _BUFFERED1_OK = False
    return _BUFFERED1_OK


def _pick_subchunks(th):
    """Split a hidden tile into sub-chunks of width in [256, 1024] (lane multiples)."""
    if th < 2 * _SUBCHUNK_MIN:
        return 1
    for n in (2, 3, 4, 6, 8):
        w = th // n
        if th % n == 0 and w % _LANE == 0 and _SUBCHUNK_MIN <= w <= _SUBCHUNK_MAX:
            return n
    return 1


def _make_kernel(use_acc, n_sub, th_sub):
    """Fused fc1 -> GELU -> fc2 kernel.

    use_acc=False: whole hidden dim handled in one grid step -> write o_ref directly (no f32
    VMEM accumulator, no zero-fill).  use_acc=True: hidden dim tiled along the innermost
    ("arbitrary") axis; an f32 VMEM scratch accumulates fc2 partials, written (not zeroed+added)
    on the first step and flushed with the bias on the last."""

    def _partial_out(x_ref, w1_ref, b1_ref, w2_ref):
        # Sub-chunked fc1 -> GELU -> fc2-accumulate: chunk j+1's fc1 matmul (MXU) overlaps
        # chunk j's erf GELU (VPU) instead of serializing dot -> gelu -> dot.
        x = x_ref[...]
        acc = None
        for j in range(n_sub):
            lo = j * th_sub
            h = jnp.dot(x, w1_ref[:, lo:lo + th_sub],
                        preferred_element_type=jnp.float32)
            h = _gelu_exact(h + b1_ref[:, lo:lo + th_sub].astype(jnp.float32))
            # fc2 fed in the weight dtype (bf16 weights -> bf16 MXU operands); f32 accumulation.
            p = jnp.dot(h.astype(w2_ref.dtype), w2_ref[lo:lo + th_sub, :],
                        preferred_element_type=jnp.float32)
            acc = p if acc is None else acc + p
        return acc

    if use_acc:
        def kernel(x_ref, w1_ref, b1_ref, w2_ref, b2_ref, o_ref, acc_ref):
            k = pl.program_id(2)
            part = _partial_out(x_ref, w1_ref, b1_ref, w2_ref)

            @pl.when(k == 0)
            def _():                        # first hidden tile: write, don't zero + add
                acc_ref[...] = part

            @pl.when(k != 0)
            def _():
                acc_ref[...] += part

            @pl.when(k == pl.num_programs(2) - 1)
            def _():
                # Dropout(p=0.0) is the identity in train and eval.
                # TODO(synk): p > 0 would use pltpu.prng_seed / pltpu.prng_random_bits here.
                o_ref[...] = (acc_ref[...] + b2_ref[...].astype(jnp.float32)).astype(o_ref.dtype)
    else:
        def kernel(x_ref, w1_ref, b1_ref, w2_ref, b2_ref, o_ref):
            part = _partial_out(x_ref, w1_ref, b1_ref, w2_ref)
            o_ref[...] = (part + b2_ref[...].astype(jnp.float32)).astype(o_ref.dtype)

    return kernel


def _pick_tm(m, pref, sub):
    tm = max(_round_up(min(pref, _round_up(m, sub)), sub), sub)
    # >= 2 token-tile grid steps when M allows (keeps both v7x TensorCores busy).
    # TODO(synk): ideally also make num_m even / >= 4 for balanced v7x core sharding.
    while tm > sub and -(-m // tm) < 2:
        tm = max(_round_up(tm // 2, sub), sub)
    # Cap M-padding waste at ~20%.
    while tm > sub and (-(-m // tm)) * tm > max(int(m * 1.2), m + sub):
        tm = max(_round_up(tm // 2, sub), sub)
    return tm


def _tile_cands(full):
    """Candidate tile sizes along a lane-padded feature dim: the full extent (untiled),
    multiples of 256 (full MXU contraction depth on v6e/v7x), and 128 as a last resort."""
    cands = [full]
    if full > 256:
        step = 256 * max(1, (full // 256) // 24)
        t = (full // 256) * 256
        while t >= 256:
            if t != full and t not in cands:
                cands.append(t)
            t -= step
        if 256 not in cands:
            cands.append(256)
    if full >= 128 and 128 not in cands:
        cands.append(128)
    return cands


def _plan(m, d_in, hidden, d_out, x_dtype, w_dtype, const_nbuf, vmem_target):
    """Pick (tm, tn, th) minimizing modeled HBM traffic + per-step overhead under the
    per-generation VMEM budget.  Resident-weight configs (num_k = num_j = 1) naturally win
    whenever they fit, since weights are then counted (and DMA'd) once."""
    x_bytes = jnp.dtype(x_dtype).itemsize
    w_bytes = jnp.dtype(w_dtype).itemsize
    sub = _sublane(x_dtype)

    d_in_pad = _round_up(d_in, _LANE)
    h_min = _round_up(hidden, _LANE)
    n_min = _round_up(d_out, _LANE)

    def vmem_bytes(tm, tn, th, num_j, num_k):
        # Weight blocks are single-buffered only when their block index is grid-constant
        # (and this Pallas build accepts pl.Buffered(1)); everything else double-buffers.
        nb_w1 = const_nbuf if num_k == 1 else 2                  # w1/b1 indexed by k only
        nb_w2 = const_nbuf if (num_k == 1 and num_j == 1) else 2
        nb_b2 = const_nbuf if num_j == 1 else 2
        w = (nb_w1 * th * (d_in_pad + 1) + nb_w2 * th * tn + nb_b2 * tn) * w_bytes
        io = 2 * tm * d_in_pad * x_bytes + 2 * tm * tn * x_bytes
        acc = tm * tn * 4 if num_k > 1 else 0
        interm = 3 * tm * (th // _pick_subchunks(th)) * 4        # live f32 fc1/GELU chunks
        return w + io + acc + interm

    # Token-tile candidates: big enough to keep a weight-streamed step MXU-bound
    # (bf16 wants ~1024 rows on v6e, f32 ~512 on v5e), shrinking for small / ragged M.
    tm0 = _pick_tm(m, 1024 if w_bytes <= 2 else 512, sub)
    tm_cands = []
    t = tm0
    while True:
        tm_cands.append(t)
        if t <= max(sub, _LANE):
            break
        t = max(_round_up(t // 2, sub), sub)

    th_cands = _tile_cands(h_min)
    tn_cands = _tile_cands(n_min)

    best, best_score = None, None
    for tm in tm_cands:
        num_m = -(-m // tm)
        m_pad = num_m * tm
        for tn in tn_cands:
            n_pad = _round_up(d_out, tn)
            num_j = n_pad // tn
            for th in th_cands:
                h_pad = _round_up(hidden, th)
                num_k = h_pad // th
                if vmem_bytes(tm, tn, th, num_j, num_k) > vmem_target:
                    continue
                w1_b = (d_in_pad + 1) * h_pad * w_bytes
                w2_b = (h_pad + 1) * n_pad * w_bytes
                w1_reads = num_m * num_j if num_k > 1 else 1     # re-streamed per (i, j) sweep
                w2_reads = num_m if (num_k > 1 or num_j > 1) else 1
                hbm = (m_pad * (d_in_pad + n_pad) * x_bytes
                       + w1_reads * w1_b + w2_reads * w2_b)
                score = hbm + num_m * num_j * num_k * _STEP_OVERHEAD_BYTES
                if th < min(256, h_min):
                    score = int(score * 1.25)   # shallow fc2 contraction underfills the MXU
                if best_score is None or score < best_score:
                    best_score = score
                    best = dict(tm=tm, tn=tn, th=th, num_j=num_j, num_k=num_k,
                                num_m=num_m, m_pad=m_pad, d_in_pad=d_in_pad,
                                h_pad=h_pad, n_pad=n_pad, n_sub=_pick_subchunks(th),
                                hbm_bytes=hbm)
    if best is not None:
        return best

    # Last resort: minimal 128x128 weight blocks, shrink the token tile until it fits.
    # TODO(synk): extremely wide D_in would additionally need a D_in reduction grid axis.
    tn, th = min(_LANE, n_min), min(_LANE, h_min)
    n_pad, h_pad = _round_up(d_out, tn), _round_up(hidden, th)
    tm = tm_cands[-1]
    while tm > sub and vmem_bytes(tm, tn, th, n_pad // tn, h_pad // th) > vmem_target:
        tm = max(_round_up(tm // 2, sub), sub)
    num_m = -(-m // tm)
    return dict(tm=tm, tn=tn, th=th, num_j=n_pad // tn, num_k=h_pad // th,
                num_m=num_m, m_pad=num_m * tm, d_in_pad=d_in_pad,
                h_pad=h_pad, n_pad=n_pad, n_sub=1,
                hbm_bytes=(num_m * tm * (d_in_pad + n_pad) * x_bytes
                           + num_m * (n_pad // tn) * (d_in_pad + 1) * h_pad * w_bytes
                           + num_m * (h_pad + 1) * n_pad * w_bytes))


def samlp_forward(x, w1, b1, w2, b2):
    """Fused SAMlp forward: y = GELU(x @ w1 + b1) @ w2 + b2 (Dropout(p=0.0) == identity).

    x: (..., D_in); w1: (D_in, H); b1: (H,); w2: (H, D_out); b2: (D_out,)
    (weights stored pre-transposed vs. PyTorch nn.Linear)."""
    return _samlp_forward_jit(x, w1, b1, w2, b2, _buffered1_supported())


@functools.partial(jax.jit, static_argnums=(5,))
def _samlp_forward_jit(x, w1, b1, w2, b2, buffered1_ok):
    *lead, d_in = x.shape
    hidden = w1.shape[1]
    d_out = w2.shape[1]
    m = int(math.prod(lead)) if lead else 1

    vmem_target, vmem_limit = _vmem_budget()
    const_nbuf = 1 if buffered1_ok else 2
    p = _plan(m, d_in, hidden, d_out, x.dtype, w1.dtype, const_nbuf, vmem_target)
    tm, tn, th = p["tm"], p["tn"], p["th"]
    num_m, num_j, num_k = p["num_m"], p["num_j"], p["num_k"]
    m_pad, d_in_pad, h_pad, n_pad = p["m_pad"], p["d_in_pad"], p["h_pad"], p["n_pad"]
    n_sub = p["n_sub"]

    # Zero padding is numerically safe: padded D_in columns are zero in both x and w1; padded
    # hidden columns give GELU(0 + 0) = 0 and contribute nothing to fc2; padded M rows and
    # D_out columns are sliced off below.  These pads are no-ops (removed by XLA) when the
    # weights are already lane/tile aligned.
    # TODO(synk): expose a one-time param-prep helper so unaligned weights are padded once,
    # not on every forward.
    x2 = _pad2(x.reshape(m, d_in), m_pad, d_in_pad)
    w1p = _pad2(w1, d_in_pad, h_pad)
    b1p = _pad2(b1.reshape(1, hidden), 1, h_pad)
    w2p = _pad2(w2, h_pad, n_pad)
    b2p = _pad2(b2.reshape(1, d_out), 1, n_pad)

    def wspec(shape, index_map, grid_constant):
        if grid_constant and buffered1_ok:
            # Grid-constant block: one VMEM buffer is enough (halves resident weight VMEM).
            return pl.BlockSpec(shape, index_map, pipeline_mode=pl.Buffered(1))
        return pl.BlockSpec(shape, index_map)

    grid_spec = pltpu.PrefetchScalarGridSpec(
        num_scalar_prefetch=0,
        grid=(num_m, num_j, num_k),              # hidden (reduction) axis last
        in_specs=[
            pl.BlockSpec((tm, d_in_pad), lambda i, j, k: (i, 0)),
            wspec((d_in_pad, th), lambda i, j, k: (0, k), num_k == 1),
            wspec((1, th), lambda i, j, k: (0, k), num_k == 1),
            wspec((th, tn), lambda i, j, k: (k, j), num_k == 1 and num_j == 1),
            wspec((1, tn), lambda i, j, k: (0, j), num_j == 1),
        ],
        out_specs=pl.BlockSpec((tm, tn), lambda i, j, k: (i, j)),
        scratch_shapes=((pltpu.VMEM((tm, tn), jnp.float32),) if num_k > 1 else ()),
    )

    cost = pl.CostEstimate(
        flops=int(2 * m_pad * d_in_pad * h_pad + 2 * m_pad * h_pad * n_pad),
        transcendentals=int(m_pad * h_pad),          # erf inside the GELU
        bytes_accessed=int(p["hbm_bytes"]),          # includes weight re-streaming factors
    )

    out = pl.pallas_call(
        _make_kernel(num_k > 1, n_sub, th // n_sub),
        out_shape=jax.ShapeDtypeStruct((m_pad, n_pad), x.dtype),
        grid_spec=grid_spec,
        compiler_params=pltpu.CompilerParams(
            dimension_semantics=("parallel", "parallel", "arbitrary"),
            vmem_limit_bytes=vmem_limit,
        ),
        cost_estimate=cost,
    )(x2, w1p, b1p, w2p, b2p)

    out = out[:m, :d_out]
    return out.reshape(*lead, d_out) if lead else out.reshape(d_out)


def samlp_reference(x, w1, b1, w2, b2):
    h = _gelu_exact(jnp.einsum("...d,dh->...h", x, w1) + b1)
    return jnp.einsum("...h,ho->...o", h, w2) + b2


if __name__ == "__main__":
    # Small shapes consistent with the module: tokens of width in_features.
    B, S = 2, 8
    in_features, hidden_features, out_features = 32, 64, 32

    key = jax.random.PRNGKey(0)
    kx, kw1, kb1, kw2, kb2 = jax.random.split(key, 5)

    x = jax.random.normal(kx, (B, S, in_features), dtype=jnp.float32)
    # Deterministic parameter init (shapes match nn.Linear, stored pre-transposed).
    w1 = jax.random.normal(kw1, (in_features, hidden_features), jnp.float32) * 0.02
    b1 = jax.random.normal(kb1, (hidden_features,), jnp.float32) * 0.02
    w2 = jax.random.normal(kw2, (hidden_features, out_features), jnp.float32) * 0.02
    b2 = jax.random.normal(kb2, (out_features,), jnp.float32) * 0.02

    y = jax.block_until_ready(samlp_forward(x, w1, b1, w2, b2))
    y_ref = samlp_reference(x, w1, b1, w2, b2)

    assert y.shape == (B, S, out_features)
    assert jnp.allclose(y, y_ref, atol=1e-5, rtol=1e-5), "mismatch vs reference"

    print("KERNEL_OK")
</pallas_src>

<mosaic_0001>
module attributes {stable_mosaic.version = 11 : i64} {
  func.func @_probe(%arg0: i32, %arg1: memref<8x128xf32, #tpu.memory_space<vmem>>, %arg2: memref<8x128xf32, #tpu.memory_space<vmem>>, %arg3: memref<8x128xf32, #tpu.memory_space<vmem>>) attributes {dimension_semantics = [#tpu.dimension_semantics<arbitrary>], iteration_bounds = array<i64: 2>, scalar_prefetch = 0 : i64, scratch_operands = 0 : i64, tpu.core_type = #tpu.core_type<tc>, window_params = [{transform_indices = @transform_0, window_bounds = array<i64: 8, 128>}, {pipeline_mode = #tpu.pipeline_mode<synchronous>, transform_indices = @transform_1, window_bounds = array<i64: 8, 128>}, {transform_indices = @transform_2, window_bounds = array<i64: 8, 128>}]} {
    %c0 = arith.constant 0 : index
    %c0_0 = arith.constant 0 : index
    %0 = vector.load %arg1[%c0, %c0_0] : memref<8x128xf32, #tpu.memory_space<vmem>>, vector<8x128xf32>
    %c0_1 = arith.constant 0 : index
    %c0_2 = arith.constant 0 : index
    %1 = vector.load %arg2[%c0_1, %c0_2] : memref<8x128xf32, #tpu.memory_space<vmem>>, vector<8x128xf32>
    %2 = arith.addf %0, %1 : vector<8x128xf32>
    %c0_3 = arith.constant 0 : index
    %c0_4 = arith.constant 0 : index
    %3 = vector.load %arg3[%c0_3, %c0_4] : memref<8x128xf32, #tpu.memory_space<vmem>>, vector<8x128xf32>
    tpu.vector_store %arg3[%c0_3, %c0_4], %2 {strides = array<i32>} : memref<8x128xf32, #tpu.memory_space<vmem>>, vector<8x128xf32>,
    return
  }
  func.func @transform_0(%arg0: i32) -> (i32, i32) {
    %c0_i32 = arith.constant 0 : i32
    %c0_i32_0 = arith.constant 0 : i32
    return %arg0, %c0_i32 : i32, i32
  }
  func.func @transform_1(%arg0: i32) -> (i32, i32) {
    %c0_i32 = arith.constant 0 : i32
    %c0_i32_0 = arith.constant 0 : i32
    %c0_i32_1 = arith.constant 0 : i32
    return %c0_i32, %c0_i32_0 : i32, i32
  }
  func.func @transform_2(%arg0: i32) -> (i32, i32) {
    %c0_i32 = arith.constant 0 : i32
    %c0_i32_0 = arith.constant 0 : i32
    return %arg0, %c0_i32 : i32, i32
  }
}

module attributes {stable_mosaic.version = 11 : i64} {
  func.func @kernel(%arg0: i32, %arg1: i32, %arg2: i32, %arg3: memref<8x128xf32, #tpu.memory_space<vmem>>, %arg4: memref<128x128xf32, #tpu.memory_space<vmem>>, %arg5: memref<1x128xf32, #tpu.memory_space<vmem>>, %arg6: memref<128x128xf32, #tpu.memory_space<vmem>>, %arg7: memref<1x128xf32, #tpu.memory_space<vmem>>, %arg8: memref<8x128xf32, #tpu.memory_space<vmem>>) attributes {dimension_semantics = [#tpu.dimension_semantics<parallel>, #tpu.dimension_semantics<parallel>, #tpu.dimension_semantics<arbitrary>], iteration_bounds = array<i64: 2, 1, 1>, scalar_prefetch = 0 : i64, scratch_operands = 0 : i64, tpu.core_type = #tpu.core_type<tc>, window_params = [{transform_indices = @transform_0, window_bounds = array<i64: 8, 128>}, {transform_indices = @transform_1, window_bounds = array<i64: 128, 128>}, {transform_indices = @transform_2, window_bounds = array<i64: 1, 128>}, {transform_indices = @transform_3, window_bounds = array<i64: 128, 128>}, {transform_indices = @transform_4, window_bounds = array<i64: 1, 128>}, {transform_indices = @transform_5, window_bounds = array<i64: 8, 128>}]} {
    %c0 = arith.constant 0 : index
    %c0_0 = arith.constant 0 : index
    %0 = vector.load %arg3[%c0, %c0_0] : memref<8x128xf32, #tpu.memory_space<vmem>>, vector<8x128xf32>
    %c0_1 = arith.constant 0 : index
    %c0_2 = arith.constant 0 : index
    %1 = vector.load %arg4[%c0_1, %c0_2] : memref<128x128xf32, #tpu.memory_space<vmem>>, vector<128x128xf32>
    %cst = arith.constant dense<0.000000e+00> : vector<8x128xf32>
    %2 = tpu.matmul %0, %1, %cst {dimension_numbers = #tpu.dot_dimension_numbers<[1], [0], [0], [1], [0, 0, 1, 1], [], []>} : vector<8x128xf32>, vector<128x128xf32>, vector<8x128xf32> -> vector<8x128xf32>
    %c0_3 = arith.constant 0 : index
    %c0_4 = arith.constant 0 : index
    %3 = vector.load %arg5[%c0_3, %c0_4] : memref<1x128xf32, #tpu.memory_space<vmem>>, vector<1x128xf32>
    %4 = vector.broadcast %3 : vector<1x128xf32> to vector<8x128xf32>
    %5 = arith.addf %2, %4 : vector<8x128xf32>
    %cst_5 = arith.constant 5.000000e-01 : f32
    %6 = vector.broadcast %cst_5 : f32 to vector<8x128xf32>
    %7 = arith.mulf %6, %5 : vector<8x128xf32>
    %cst_6 = arith.constant 0.707106769 : f32
    %8 = vector.broadcast %cst_6 : f32 to vector<8x128xf32>
    %9 = arith.mulf %5, %8 : vector<8x128xf32>
    %10 = math.erf %9 : vector<8x128xf32>
    %cst_7 = arith.constant 1.000000e+00 : f32
    %11 = vector.broadcast %cst_7 : f32 to vector<8x128xf32>
    %12 = arith.addf %11, %10 : vector<8x128xf32>
    %13 = arith.mulf %7, %12 : vector<8x128xf32>
    %c0_8 = arith.constant 0 : index
    %c0_9 = arith.constant 0 : index
    %14 = vector.load %arg6[%c0_8, %c0_9] : memref<128x128xf32, #tpu.memory_space<vmem>>, vector<128x128xf32>
    %cst_10 = arith.constant dense<0.000000e+00> : vector<8x128xf32>
    %15 = tpu.matmul %13, %14, %cst_10 {dimension_numbers = #tpu.dot_dimension_numbers<[1], [0], [0], [1], [0, 0, 1, 1], [], []>} : vector<8x128xf32>, vector<128x128xf32>, vector<8x128xf32> -> vector<8x128xf32>
    %c0_11 = arith.constant 0 : index
    %c0_12 = arith.constant 0 : index
    %16 = vector.load %arg7[%c0_11, %c0_12] : memref<1x128xf32, #tpu.memory_space<vmem>>, vector<1x128xf32>
    %17 = vector.broadcast %16 : vector<1x128xf32> to vector<8x128xf32>
    %18 = arith.addf %15, %17 : vector<8x128xf32>
    %c0_13 = arith.constant 0 : index
    %c0_14 = arith.constant 0 : index
    %19 = vector.load %arg8[%c0_13, %c0_14] : memref<8x128xf32, #tpu.memory_space<vmem>>, vector<8x128xf32>
    tpu.vector_store %arg8[%c0_13, %c0_14], %18 {strides = array<i32>} : memref<8x128xf32, #tpu.memory_space<vmem>>, vector<8x128xf32>,
    return
  }
  func.func @transform_0(%arg0: i32, %arg1: i32, %arg2: i32) -> (i32, i32) {
    %c0_i32 = arith.constant 0 : i32
    %c0_i32_0 = arith.constant 0 : i32
    return %arg0, %c0_i32 : i32, i32
  }
  func.func @transform_1(%arg0: i32, %arg1: i32, %arg2: i32) -> (i32, i32) {
    %c0_i32 = arith.constant 0 : i32
    %c0_i32_0 = arith.constant 0 : i32
    return %c0_i32, %arg2 : i32, i32
  }
  func.func @transform_2(%arg0: i32, %arg1: i32, %arg2: i32) -> (i32, i32) {
    %c0_i32 = arith.constant 0 : i32
    %c0_i32_0 = arith.constant 0 : i32
    return %c0_i32, %arg2 : i32, i32
  }
  func.func @transform_3(%arg0: i32, %arg1: i32, %arg2: i32) -> (i32, i32) {
    %c0_i32 = arith.constant 0 : i32
    return %arg2, %arg1 : i32, i32
  }
  func.func @transform_4(%arg0: i32, %arg1: i32, %arg2: i32) -> (i32, i32) {
    %c0_i32 = arith.constant 0 : i32
    %c0_i32_0 = arith.constant 0 : i32
    return %c0_i32, %arg1 : i32, i32
  }
  func.func @transform_5(%arg0: i32, %arg1: i32, %arg2: i32) -> (i32, i32) {
    %c0_i32 = arith.constant 0 : i32
    return %arg0, %arg1 : i32, i32
  }
}

</mosaic_0001>

<llo_original>
// kernel: tpu_custom_call.1
$region0: #{tpu_custom_call.1}
  #allocation0 [shape = 'u32[]', space=smem, size = 0x4, offset = 0x4, fixed_abs, tag = 'smem constant byte address 0x4 - core index']
  #allocation1 [shape = 'u32[72,128]{1,0:T(1,128)}', space=vmem, size = 0x9000, scoped, tag = 'internal scratch']
  %s0 = inlined_call_operand.hbm [shape: f32[16,128], index: 0, kind: input, shape index: {}]
  %s1 = inlined_call_operand.hbm [shape: f32[8,128], index: 1, kind: input, shape index: {}]
  %s2 = inlined_call_operand.hbm [shape: f32[16,128], index: 2, kind: output, shape index: {}]
  %s3 = sld [smem:[#allocation0]]
  $region49: #{tpu_custom_call.1} parent=0
    _
  %s5 = ssub.s32 1, %s3
  %s6 = scalar_select 0, %s5, %s3
  $region1: #{tpu_custom_call.1} parent=0
    #allocation2 [shape = 'u8[8192]{0}', space=vmem, size = 0x2000, scoped, tag = 'input window, operand 0']
    #allocation3 [shape = 's32[2]{0}', space=sflag, size = 0x8, scoped, tag = 'scoped memory for tpu_custom_call.1']
    #allocation4 [shape = 's32[2]{0}', space=sflag, size = 0x8, scoped, tag = 'scoped memory for tpu_custom_call.1']
    #allocation5 [shape = 'u8[4096]{0}', space=vmem, size = 0x1000, scoped, tag = 'input window, operand 1, single buffered']
    #allocation6 [shape = 's32[1]{0}', space=sflag, size = 0x4, scoped, tag = 'scoped memory for tpu_custom_call.1']
    #allocation7 [shape = 'u8[8192]{0}', space=vmem, size = 0x2000, scoped, tag = 'output window, operand 0']
    %7 = vsyncpa [#allocation3], 0
    %s8 = scalar_lea.sflag [#allocation3], 1
    %9 = vsyncpa %s8, 0
    %10 = vsyncpa [#allocation6], 0
    %11 = vsyncpa [#allocation4], 0
    %s12 = scalar_lea.sflag [#allocation4], 1
    %13 = vsyncpa %s12, 0
    loop: start=0, step=1, limit=4
    $region2: #{tpu_custom_call.1} parent=1 // loop_pre_header
      _
    $region3: #{tpu_custom_call.1} parent=1 // loop_header
      %s15 = sphi 0, %s19
      %p16 = scmp.ge.s32.totalorder %s15, 4
      %s25 = sphi 0, %s27
      %s28 = sphi 0, %s25
      %s29 = sphi 0, %s28
      %s45 = sphi 0, %s29
      %s49 = sphi 0, %s49
      %s51 = sphi 0, %s49
      %s52 = sphi 0, %s51
      %s66 = sphi 0, %s52
      %s72 = sphi 0, %s74
      %s75 = sphi 0, %s72
      %s76 = sphi 0, %s75
      %s92 = sphi 0, %s76
    $region4: #{tpu_custom_call.1} parent=1 // loop_header_branch
      %18 = sbr.rel (%p16) target = $region8
    $region5: #{tpu_custom_call.1} parent=1 // loop_body
      %s20 = ssub.s32 %s15, 1
      %s21 = ssub.s32 %s15, 2
      %s22 = sadd.s32 %s15, 1
      %s23 = ssub.s32 %s15, %s22
      %p24 = scmp.eq.s32.totalorder %s23, 0
      %s26 = sadd.s32 %s25, 1
      %s27 = scalar_select %p24, %s25, %s26
      %p30 = pneg %p24
      %p31 = scmp.eq.s32.totalorder %s15, 1
      %p32 = por %p30, %p31
      %p33 = scmp.ne.s32.totalorder %s25, %s28
      %p34 = scmp.eq.s32.totalorder %s15, 0
      %p35 = por %p33, %p34
      %p36 = scmp.ne.s32.totalorder %s25, %s28
      %p37 = scmp.eq.s32.totalorder %s20, 1
      %p38 = por %p36, %p37
      %p39 = scmp.ne.s32.totalorder %s28, %s29
      %p40 = scmp.eq.s32.totalorder %s20, 0
      %p41 = por %p39, %p40
      %p42 = scmp.ne.s32.totalorder %s28, %s29
      %p43 = scmp.eq.s32.totalorder %s21, 1
      %p44 = por %p42, %p43
      %p46 = scmp.ne.s32.totalorder %s29, %s45
      %p47 = scmp.eq.s32.totalorder %s21, 0
      %p48 = por %p46, %p47
      %s50 = sadd.s32 %s49, 1
      %p53 = scmp.eq.s32.totalorder %s15, 1
      %p54 = scmp.ne.s32.totalorder %s49, %s51
      %p55 = scmp.eq.s32.totalorder %s15, 0
      %p56 = por %p54, %p55
      %p57 = scmp.ne.s32.totalorder %s49, %s51
      %p58 = scmp.eq.s32.totalorder %s20, 1
      %p59 = por %p57, %p58
      %p60 = scmp.ne.s32.totalorder %s51, %s52
      %p61 = scmp.eq.s32.totalorder %s20, 0
      %p62 = por %p60, %p61
      %p63 = scmp.ne.s32.totalorder %s51, %s52
      %p64 = scmp.eq.s32.totalorder %s21, 1
      %p65 = por %p63, %p64
      %p67 = scmp.ne.s32.totalorder %s52, %s66
      %p68 = scmp.eq.s32.totalorder %s21, 0
      %p69 = por %p67, %p68
      %s70 = ssub.s32 %s15, %s22
      %p71 = scmp.eq.s32.totalorder %s70, 0
      %s73 = sadd.s32 %s72, 1
      %s74 = scalar_select %p71, %s72, %s73
      %p77 = pneg %p71
      %p78 = scmp.eq.s32.totalorder %s15, 1
      %p79 = por %p77, %p78
      %p80 = scmp.ne.s32.totalorder %s72, %s75
      %p81 = scmp.eq.s32.totalorder %s15, 0
      %p82 = por %p80, %p81
      %p83 = scmp.ne.s32.totalorder %s72, %s75
      %p84 = scmp.eq.s32.totalorder %s20, 1
      %p85 = por %p83, %p84
      %p86 = scmp.ne.s32.totalorder %s75, %s76
      %p87 = scmp.eq.s32.totalorder %s20, 0
      %p88 = por %p86, %p87
      %p89 = scmp.ne.s32.totalorder %s75, %s76
      %p90 = scmp.eq.s32.totalorder %s21, 1
      %p91 = por %p89, %p90
      %p93 = scmp.ne.s32.totalorder %s76, %s92
      %p94 = scmp.eq.s32.totalorder %s21, 0
      %p95 = por %p93, %p94
      %p96 = scmp.le.s32.totalorder 1, %s15
      %p97 = scmp.lt.s32.totalorder %s15, 3
      %p98 = pnand %p96, %p97
      %p99 = pneg %p98
      // Predicated region
      $region9: #{tpu_custom_call.1} parent=5 // pred_check
        _
      $region10: #{tpu_custom_call.1} parent=5 // pred_check_branch
        %101 = sbr.rel (%p98) target = $region12
      $region11: #{tpu_custom_call.1} parent=5 // pred_region
        %s102 = ssub.s32 %s15, 1
        // Predicated region
        $region13: #{tpu_custom_call.1} parent=11 // pred_check
          %p103 = pneg %p62
        $region14: #{tpu_custom_call.1} parent=11 // pred_check_branch
          %105 = sbr.rel (%p103) target = $region16
        $region15: #{tpu_custom_call.1} parent=11 // pred_region
          %107 = vsyncadd [#allocation6], 0
          %s109 = sshll.u32 %s1, 4
          %s110 = int_to_ptr.hbm [resolvable:$true] %s109
          %s111 = sshll.u32 [#allocation5], 4
          %s112 = int_to_ptr.vmem [resolvable:$true] %s111
          %114 = dma.hbm_to_vmem [thread:$0]  %s110, 128, %s112, [#allocation6]
        $region16: #{tpu_custom_call.1} parent=11 // pred_fallthru
          _
      $region12: #{tpu_custom_call.1} parent=5 // pred_fallthru
        _
      %p115 = scmp.lt.s32.totalorder %s15, 2
      // Predicated region
      $region17: #{tpu_custom_call.1} parent=5 // pred_check
        %p116 = pneg %p115
      $region18: #{tpu_custom_call.1} parent=5 // pred_check_branch
        %118 = sbr.rel (%p116) target = $region20
      $region19: #{tpu_custom_call.1} parent=5 // pred_region
        // Predicated region
        $region21: #{tpu_custom_call.1} parent=19 // pred_check
          %p119 = pneg %p35
        $region22: #{tpu_custom_call.1} parent=19 // pred_check_branch
          %121 = sbr.rel (%p119) target = $region24
        $region23: #{tpu_custom_call.1} parent=19 // pred_region
          %s122 = sand.u32 %s25, 1
          %s123 = scalar_lea.sflag [#allocation3], %s122
          %s124 = sand.u32 %s25, 1
          %s125 = smul.addr %s124, 8
          %s126 = scalar_lea.vmem [#allocation2], %s125
          %128 = vsyncadd %s123, 0
          %s129 = smul.addr %s15, 8
          %s130 = scalar_lea.hbm %s0, %s129
          %s132 = sshll.u32 %s130, 4
          %s133 = int_to_ptr.hbm [resolvable:$true] %s132
          %s134 = sshll.u32 %s126, 4
          %s135 = int_to_ptr.vmem [resolvable:$true] %s134
          %137 = dma.hbm_to_vmem [thread:$0]  %s133, 128, %s135, %s123
        $region24: #{tpu_custom_call.1} parent=19 // pred_fallthru
          _
      $region20: #{tpu_custom_call.1} parent=5 // pred_fallthru
        _
      %p138 = scmp.le.s32.totalorder 1, %s15
      %p139 = scmp.lt.s32.totalorder %s15, 3
      %p140 = pnand %p138, %p139
      %p141 = pneg %p140
      // Predicated region
      $region25: #{tpu_custom_call.1} parent=5 // pred_check
        _
      $region26: #{tpu_custom_call.1} parent=5 // pred_check_branch
        %143 = sbr.rel (%p140) target = $region28
      $region27: #{tpu_custom_call.1} parent=5 // pred_region
        %s144 = ssub.s32 %s15, 1
        %s145 = sand.u32 %s28, 1
        %s146 = scalar_lea.sflag [#allocation3], %s145
        %s147 = sand.u32 %s28, 1
        %s148 = smul.addr %s147, 8
        %s149 = scalar_lea.vmem [#allocation2], %s148
        // Predicated region
        $region29: #{tpu_custom_call.1} parent=27 // pred_check
          %p150 = pneg %p41
        $region30: #{tpu_custom_call.1} parent=27 // pred_check_branch
          %152 = sbr.rel (%p150) target = $region32
        $region31: #{tpu_custom_call.1} parent=27 // pred_region
          %154 = dma.done %s146, 128
        $region32: #{tpu_custom_call.1} parent=27 // pred_fallthru
          _
        // Predicated region
        $region33: #{tpu_custom_call.1} parent=27 // pred_check
          %p155 = pneg %p62
        $region34: #{tpu_custom_call.1} parent=27 // pred_check_branch
          %157 = sbr.rel (%p155) target = $region36
        $region35: #{tpu_custom_call.1} parent=27 // pred_region
          %159 = dma.done [#allocation6], 128
        $region36: #{tpu_custom_call.1} parent=27 // pred_fallthru
          _
        %s160 = sand.u32 %s28, 1
        %s161 = scalar_lea.sflag [#allocation3], %s160
        %s162 = sand.u32 %s28, 1
        %s163 = smul.addr %s162, 8
        %s164 = scalar_lea.vmem [#allocation2], %s163
        %p165 = pneg %p41
        %p166 = pneg %p38
        %p167 = pneg %p62
        %p168 = pneg %p59
        %p169 = pneg %p88
        %p170 = pneg %p85
        %s171 = sand.u32 %s75, 1
        %s172 = scalar_lea.sflag [#allocation4], %s171
        %s173 = sand.u32 %s75, 1
        %s174 = smul.addr %s173, 8
        %s175 = scalar_lea.vmem [#allocation7], %s174
        %v176 = vld [vmem:[%s149] sm:$0xff]
        %v177 = vld [vmem:[#allocation5] sm:$0xff]
        %v178 = vadd.f32 %v176, %v177
        %179 = vst [vmem:[%s175] sm:$0xff] %v178
        %s180 = sand.u32 %s75, 1
        %s181 = scalar_lea.sflag [#allocation4], %s180
        %s182 = sand.u32 %s75, 1
        %s183 = smul.addr %s182, 8
        %s184 = scalar_lea.vmem [#allocation7], %s183
        // Predicated region
        $region37: #{tpu_custom_call.1} parent=27 // pred_check
          %p185 = pneg %p85
        $region38: #{tpu_custom_call.1} parent=27 // pred_check_branch
          %187 = sbr.rel (%p185) target = $region40
        $region39: #{tpu_custom_call.1} parent=27 // pred_region
          %189 = vsyncadd %s181, 0
          %s190 = smul.addr %s20, 8
          %s191 = scalar_lea.hbm %s2, %s190
          %s193 = sshll.u32 %s184, 4
          %s194 = int_to_ptr.vmem [resolvable:$true] %s193
          %s195 = sshll.u32 %s191, 4
          %s196 = int_to_ptr.hbm [resolvable:$true] %s195
          %198 = dma.vmem_to_hbm [thread:$0]  %s194, 128, %s196, %s181
        $region40: #{tpu_custom_call.1} parent=27 // pred_fallthru
          _
      $region28: #{tpu_custom_call.1} parent=5 // pred_fallthru
        _
      %p199 = scmp.le.s32.totalorder 2, %s15
      // Predicated region
      $region41: #{tpu_custom_call.1} parent=5 // pred_check
        %p200 = pneg %p199
      $region42: #{tpu_custom_call.1} parent=5 // pred_check_branch
        %202 = sbr.rel (%p200) target = $region44
      $region43: #{tpu_custom_call.1} parent=5 // pred_region
        %s203 = ssub.s32 %s15, 2
        // Predicated region
        $region45: #{tpu_custom_call.1} parent=43 // pred_check
          %p204 = pneg %p91
        $region46: #{tpu_custom_call.1} parent=43 // pred_check_branch
          %206 = sbr.rel (%p204) target = $region48
        $region47: #{tpu_custom_call.1} parent=43 // pred_region
          %s207 = sand.u32 %s76, 1
          %s208 = scalar_lea.sflag [#allocation4], %s207
          %s209 = sand.u32 %s76, 1
          %s210 = smul.addr %s209, 8
          %s211 = scalar_lea.vmem [#allocation7], %s210
          %213 = dma.done %s208, 128
        $region48: #{tpu_custom_call.1} parent=43 // pred_fallthru
          _
      $region44: #{tpu_custom_call.1} parent=5 // pred_fallthru
        _
    $region6: #{tpu_custom_call.1} parent=1 // loop_footer
      %s19 = sadd.s32 1, %s15
    $region7: #{tpu_custom_call.1} parent=1 // loop_footer_branch
      %14 = sbr.rel target = $region3
    $region8: #{tpu_custom_call.1} parent=1 // loop_exit
      _
    %214 = vsyncpa [#allocation3], 1
    %s215 = scalar_lea.sflag [#allocation3], 1
    %216 = vsyncpa %s215, 1
    %217 = vsyncpa [#allocation6], 1
    %218 = vsyncpa [#allocation4], 1
    %s219 = scalar_lea.sflag [#allocation4], 1
    %220 = vsyncpa %s219, 1

// kernel: _samlp_forward_jit.1
$region0: #{_samlp_forward_jit.1}
  #allocation0 [shape = 'u32[]', space=smem, size = 0x4, offset = 0x4, fixed_abs, tag = 'smem constant byte address 0x4 - core index']
  #allocation1 [shape = 'u32[72,128]{1,0:T(1,128)}', space=vmem, size = 0x9000, scoped, tag = 'internal scratch']
  %s0 = inlined_call_operand.vmem [shape: f32[16,128], index: 0, kind: input, shape index: {}]
  %s1 = inlined_call_operand.vmem [shape: f32[128,128], index: 1, kind: input, shape index: {}]
  %s2 = inlined_call_operand.vmem [shape: f32[1,128], index: 2, kind: input, shape index: {}]
  %s3 = inlined_call_operand.vmem [shape: f32[128,128], index: 3, kind: input, shape index: {}]
  %s4 = inlined_call_operand.vmem [shape: f32[1,128], index: 4, kind: input, shape index: {}]
  %s5 = inlined_call_operand.vmem [shape: f32[16,128], index: 5, kind: output, shape index: {}]
  %s6 = sld [smem:[#allocation0]]
  $region53: #{_samlp_forward_jit.1} parent=0
    _
  %s8 = ssub.s32 1, %s6
  %s9 = scalar_select 0, %s8, %s6
  loop: start=0, step=1, limit=4
  $region2: #{_samlp_forward_jit.1} parent=0 // loop_pre_header
    _
  $region3: #{_samlp_forward_jit.1} parent=0 // loop_header
    %s11 = sphi 0, %s15
    %p12 = scmp.ge.s32.totalorder %s11, 4
    %s18 = sphi 0, %s37
    %s19 = sphi 0, %s33
    %s20 = sphi 0, %s29
    %s21 = sphi 0, %s18
    %s22 = sphi 0, %s19
    %s23 = sphi 0, %s20
    %s24 = sphi 0, %s21
    %s25 = sphi 0, %s22
    %s26 = sphi 0, %s23
    %s40 = sphi 0, %s42
    %s43 = sphi 0, %s40
    %s44 = sphi 0, %s43
    %s60 = sphi 0, %s44
    %s66 = sphi 0, %s68
    %s69 = sphi 0, %s66
    %s70 = sphi 0, %s69
    %s86 = sphi 0, %s70
    %s92 = sphi 0, %s94
    %s95 = sphi 0, %s92
    %s96 = sphi 0, %s95
    %s112 = sphi 0, %s96
    %s120 = sphi 0, %s122
    %s123 = sphi 0, %s120
    %s124 = sphi 0, %s123
    %s140 = sphi 0, %s124
    %s146 = sphi 0, %s148
    %s149 = sphi 0, %s146
    %s150 = sphi 0, %s149
    %s166 = sphi 0, %s150
    %s174 = sphi 0, %s176
    %s177 = sphi 0, %s174
    %s178 = sphi 0, %s177
    %s194 = sphi 0, %s178
  $region4: #{_samlp_forward_jit.1} parent=0 // loop_header_branch
    %14 = sbr.rel (%p12) target = $region8
  $region5: #{_samlp_forward_jit.1} parent=0 // loop_body
    %s16 = ssub.s32 %s11, 1
    %s17 = ssub.s32 %s11, 2
    %s27 = sadd.s32 1, %s20
    %p28 = scmp.ge.s32.totalorder %s27, 1
    %s29 = scalar_select %p28, 0, %s27
    %s30 = sadd.s32 1, %s19
    %s31 = scalar_select %p28, %s30, %s19
    %p32 = scmp.ge.s32.totalorder %s31, 1
    %s33 = scalar_select %p32, 0, %s31
    %s34 = sadd.s32 1, %s18
    %s35 = scalar_select %p32, %s34, %s18
    %p36 = scmp.ge.s32.totalorder %s35, 2
    %s37 = scalar_select %p36, 0, %s35
    %s38 = ssub.s32 %s18, %s37
    %p39 = scmp.eq.s32.totalorder %s38, 0
    %s41 = sadd.s32 %s40, 1
    %s42 = scalar_select %p39, %s40, %s41
    %p45 = pneg %p39
    %p46 = scmp.eq.s32.totalorder %s11, 1
    %p47 = por %p45, %p46
    %p48 = scmp.ne.s32.totalorder %s40, %s43
    %p49 = scmp.eq.s32.totalorder %s11, 0
    %p50 = por %p48, %p49
    %p51 = scmp.ne.s32.totalorder %s40, %s43
    %p52 = scmp.eq.s32.totalorder %s16, 1
    %p53 = por %p51, %p52
    %p54 = scmp.ne.s32.totalorder %s43, %s44
    %p55 = scmp.eq.s32.totalorder %s16, 0
    %p56 = por %p54, %p55
    %p57 = scmp.ne.s32.totalorder %s43, %s44
    %p58 = scmp.eq.s32.totalorder %s17, 1
    %p59 = por %p57, %p58
    %p61 = scmp.ne.s32.totalorder %s44, %s60
    %p62 = scmp.eq.s32.totalorder %s17, 0
    %p63 = por %p61, %p62
    %s64 = ssub.s32 %s20, %s29
    %p65 = scmp.eq.s32.totalorder %s64, 0
    %s67 = sadd.s32 %s66, 1
    %s68 = scalar_select %p65, %s66, %s67
    %p71 = pneg %p65
    %p72 = scmp.eq.s32.totalorder %s11, 1
    %p73 = por %p71, %p72
    %p74 = scmp.ne.s32.totalorder %s66, %s69
    %p75 = scmp.eq.s32.totalorder %s11, 0
    %p76 = por %p74, %p75
    %p77 = scmp.ne.s32.totalorder %s66, %s69
    %p78 = scmp.eq.s32.totalorder %s16, 1
    %p79 = por %p77, %p78
    %p80 = scmp.ne.s32.totalorder %s69, %s70
    %p81 = scmp.eq.s32.totalorder %s16, 0
    %p82 = por %p80, %p81
    %p83 = scmp.ne.s32.totalorder %s69, %s70
    %p84 = scmp.eq.s32.totalorder %s17, 1
    %p85 = por %p83, %p84
    %p87 = scmp.ne.s32.totalorder %s70, %s86
    %p88 = scmp.eq.s32.totalorder %s17, 0
    %p89 = por %p87, %p88
    %s90 = ssub.s32 %s20, %s29
    %p91 = scmp.eq.s32.totalorder %s90, 0
    %s93 = sadd.s32 %s92, 1
    %s94 = scalar_select %p91, %s92, %s93
    %p97 = pneg %p91
    %p98 = scmp.eq.s32.totalorder %s11, 1
    %p99 = por %p97, %p98
    %p100 = scmp.ne.s32.totalorder %s92, %s95
    %p101 = scmp.eq.s32.totalorder %s11, 0
    %p102 = por %p100, %p101
    %p103 = scmp.ne.s32.totalorder %s92, %s95
    %p104 = scmp.eq.s32.totalorder %s16, 1
    %p105 = por %p103, %p104
    %p106 = scmp.ne.s32.totalorder %s95, %s96
    %p107 = scmp.eq.s32.totalorder %s16, 0
    %p108 = por %p106, %p107
    %p109 = scmp.ne.s32.totalorder %s95, %s96
    %p110 = scmp.eq.s32.totalorder %s17, 1
    %p111 = por %p109, %p110
    %p113 = scmp.ne.s32.totalorder %s96, %s112
    %p114 = scmp.eq.s32.totalorder %s17, 0
    %p115 = por %p113, %p114
    %s116 = ssub.s32 %s20, %s29
    %s117 = ssub.s32 %s19, %s33
    %s118 = sor.u32 %s116, %s117
    %p119 = scmp.eq.s32.totalorder %s118, 0
    %s121 = sadd.s32 %s120, 1
    %s122 = scalar_select %p119, %s120, %s121
    %p125 = pneg %p119
    %p126 = scmp.eq.s32.totalorder %s11, 1
    %p127 = por %p125, %p126
    %p128 = scmp.ne.s32.totalorder %s120, %s123
    %p129 = scmp.eq.s32.totalorder %s11, 0
    %p130 = por %p128, %p129
    %p131 = scmp.ne.s32.totalorder %s120, %s123
    %p132 = scmp.eq.s32.totalorder %s16, 1
    %p133 = por %p131, %p132
    %p134 = scmp.ne.s32.totalorder %s123, %s124
    %p135 = scmp.eq.s32.totalorder %s16, 0
    %p136 = por %p134, %p135
    %p137 = scmp.ne.s32.totalorder %s123, %s124
    %p138 = scmp.eq.s32.totalorder %s17, 1
    %p139 = por %p137, %p138
    %p141 = scmp.ne.s32.totalorder %s124, %s140
    %p142 = scmp.eq.s32.totalorder %s17, 0
    %p143 = por %p141, %p142
    %s144 = ssub.s32 %s19, %s33
    %p145 = scmp.eq.s32.totalorder %s144, 0
    %s147 = sadd.s32 %s146, 1
    %s148 = scalar_select %p145, %s146, %s147
    %p151 = pneg %p145
    %p152 = scmp.eq.s32.totalorder %s11, 1
    %p153 = por %p151, %p152
    %p154 = scmp.ne.s32.totalorder %s146, %s149
    %p155 = scmp.eq.s32.totalorder %s11, 0
    %p156 = por %p154, %p155
    %p157 = scmp.ne.s32.totalorder %s146, %s149
    %p158 = scmp.eq.s32.totalorder %s16, 1
    %p159 = por %p157, %p158
    %p160 = scmp.ne.s32.totalorder %s149, %s150
    %p161 = scmp.eq.s32.totalorder %s16, 0
    %p162 = por %p160, %p161
    %p163 = scmp.ne.s32.totalorder %s149, %s150
    %p164 = scmp.eq.s32.totalorder %s17, 1
    %p165 = por %p163, %p164
    %p167 = scmp.ne.s32.totalorder %s150, %s166
    %p168 = scmp.eq.s32.totalorder %s17, 0
    %p169 = por %p167, %p168
    %s170 = ssub.s32 %s18, %s37
    %s171 = ssub.s32 %s19, %s33
    %s172 = sor.u32 %s170, %s171
    %p173 = scmp.eq.s32.totalorder %s172, 0
    %s175 = sadd.s32 %s174, 1
    %s176 = scalar_select %p173, %s174, %s175
    %p179 = pneg %p173
    %p180 = scmp.eq.s32.totalorder %s11, 1
    %p181 = por %p179, %p180
    %p182 = scmp.ne.s32.totalorder %s174, %s177
    %p183 = scmp.eq.s32.totalorder %s11, 0
    %p184 = por %p182, %p183
    %p185 = scmp.ne.s32.totalorder %s174, %s177
    %p186 = scmp.eq.s32.totalorder %s16, 1
    %p187 = por %p185, %p186
    %p188 = scmp.ne.s32.totalorder %s177, %s178
    %p189 = scmp.eq.s32.totalorder %s16, 0
    %p190 = por %p188, %p189
    %p191 = scmp.ne.s32.totalorder %s177, %s178
    %p192 = scmp.eq.s32.totalorder %s17, 1
    %p193 = por %p191, %p192
    %p195 = scmp.ne.s32.totalorder %s178, %s194
    %p196 = scmp.eq.s32.totalorder %s17, 0
    %p197 = por %p195, %p196
    %p198 = scmp.le.s32.totalorder 1, %s11
    %p199 = scmp.lt.s32.totalorder %s11, 3
    %p200 = pnand %p198, %p199
    %p201 = pneg %p200
    // Predicated region
    $region9: #{_samlp_forward_jit.1} parent=5 // pred_check
      _
    $region10: #{_samlp_forward_jit.1} parent=5 // pred_check_branch
      %203 = sbr.rel (%p200) target = $region12
    $region11: #{_samlp_forward_jit.1} parent=5 // pred_region
      %s204 = ssub.s32 %s11, 1
      // Predicated region
      $region13: #{_samlp_forward_jit.1} parent=11 // pred_check
        %p205 = pneg %p82
      $region14: #{_samlp_forward_jit.1} parent=11 // pred_check_branch
        %207 = sbr.rel (%p205) target = $region16
      $region15: #{_samlp_forward_jit.1} parent=11 // pred_region
        %p208 = scmp.lt.s32.totalorder %s23, 0
        %s209 = scalar_select %p208, %s23, 0
        %s210 = smul.addr %s209, 8
        %s211 = scalar_lea.vmem %s1, %s210
      $region16: #{_samlp_forward_jit.1} parent=11 // pred_fallthru
        _
      // Predicated region
      $region17: #{_samlp_forward_jit.1} parent=11 // pred_check
        %p212 = pneg %p108
      $region18: #{_samlp_forward_jit.1} parent=11 // pred_check_branch
        %214 = sbr.rel (%p212) target = $region20
      $region19: #{_samlp_forward_jit.1} parent=11 // pred_region
        %p215 = scmp.lt.s32.totalorder %s23, 0
        %s216 = scalar_select %p215, %s23, 0
        %s217 = scalar_lea.vmem %s2, %s216
      $region20: #{_samlp_forward_jit.1} parent=11 // pred_fallthru
        _
      // Predicated region
      $region21: #{_samlp_forward_jit.1} parent=11 // pred_check
        %p218 = pneg %p136
      $region22: #{_samlp_forward_jit.1} parent=11 // pred_check_branch
        %220 = sbr.rel (%p218) target = $region24
      $region23: #{_samlp_forward_jit.1} parent=11 // pred_region
        %s221 = smul.u32 16, %s23
        %p222 = scmp.lt.s32.totalorder %s221, 15
        %s223 = scalar_select %p222, %s221, 15
        %p224 = scmp.lt.s32.totalorder %s22, 0
        %s225 = scalar_select %p224, %s22, 0
        %s226 = sadd.s32 %s225, %s223
        %s227 = smul.addr %s226, 8
        %s228 = scalar_lea.vmem %s3, %s227
        %s229 = smul.u32 16, %s23
      $region24: #{_samlp_forward_jit.1} parent=11 // pred_fallthru
        _
      // Predicated region
      $region25: #{_samlp_forward_jit.1} parent=11 // pred_check
        %p230 = pneg %p162
      $region26: #{_samlp_forward_jit.1} parent=11 // pred_check_branch
        %232 = sbr.rel (%p230) target = $region28
      $region27: #{_samlp_forward_jit.1} parent=11 // pred_region
        %p233 = scmp.lt.s32.totalorder %s22, 0
        %s234 = scalar_select %p233, %s22, 0
        %s235 = scalar_lea.vmem %s4, %s234
      $region28: #{_samlp_forward_jit.1} parent=11 // pred_fallthru
        _
    $region12: #{_samlp_forward_jit.1} parent=5 // pred_fallthru
      _
    %p236 = scmp.lt.s32.totalorder %s11, 2
    // Predicated region
    $region29: #{_samlp_forward_jit.1} parent=5 // pred_check
      %p237 = pneg %p236
    $region30: #{_samlp_forward_jit.1} parent=5 // pred_check_branch
      %239 = sbr.rel (%p237) target = $region32
    $region31: #{_samlp_forward_jit.1} parent=5 // pred_region
      // Predicated region
      $region33: #{_samlp_forward_jit.1} parent=31 // pred_check
        %p240 = pneg %p50
      $region34: #{_samlp_forward_jit.1} parent=31 // pred_check_branch
        %242 = sbr.rel (%p240) target = $region36
      $region35: #{_samlp_forward_jit.1} parent=31 // pred_region
        %p243 = scmp.lt.s32.totalorder %s18, 1
        %s244 = scalar_select %p243, %s18, 1
        %s245 = smul.addr %s244, 8
        %s246 = scalar_lea.vmem %s0, %s245
      $region36: #{_samlp_forward_jit.1} parent=31 // pred_fallthru
        _
    $region32: #{_samlp_forward_jit.1} parent=5 // pred_fallthru
      _
    %p247 = scmp.le.s32.totalorder 1, %s11
    %p248 = scmp.lt.s32.totalorder %s11, 3
    %p249 = pnand %p247, %p248
    %p250 = pneg %p249
    // Predicated region
    $region37: #{_samlp_forward_jit.1} parent=5 // pred_check
      _
    $region38: #{_samlp_forward_jit.1} parent=5 // pred_check_branch
      %252 = sbr.rel (%p249) target = $region40
    $region39: #{_samlp_forward_jit.1} parent=5 // pred_region
      %s253 = ssub.s32 %s11, 1
      %p254 = scmp.lt.s32.totalorder %s21, 1
      %s255 = scalar_select %p254, %s21, 1
      %s256 = smul.addr %s255, 8
      %s257 = scalar_lea.vmem %s0, %s256
      %p258 = pneg %p56
      %p259 = pneg %p53
      %p260 = scmp.lt.s32.totalorder %s23, 0
      %s261 = scalar_select %p260, %s23, 0
      %s262 = smul.addr %s261, 8
      %s263 = scalar_lea.vmem %s1, %s262
      %p264 = pneg %p82
      %p265 = pneg %p79
      %p266 = scmp.lt.s32.totalorder %s23, 0
      %s267 = scalar_select %p266, %s23, 0
      %s268 = scalar_lea.vmem %s2, %s267
      %p269 = pneg %p108
      %p270 = pneg %p105
      %s271 = smul.u32 16, %s23
      %p272 = scmp.lt.s32.totalorder %s271, 15
      %s273 = scalar_select %p272, %s271, 15
      %p274 = scmp.lt.s32.totalorder %s22, 0
      %s275 = scalar_select %p274, %s22, 0
      %s276 = sadd.s32 %s275, %s273
      %s277 = smul.addr %s276, 8
      %s278 = scalar_lea.vmem %s3, %s277
      %p279 = pneg %p136
      %p280 = pneg %p133
      %p281 = scmp.lt.s32.totalorder %s22, 0
      %s282 = scalar_select %p281, %s22, 0
      %s283 = scalar_lea.vmem %s4, %s282
      %p284 = pneg %p162
      %p285 = pneg %p159
      %p286 = pneg %p190
      %p287 = pneg %p187
      %p288 = scmp.lt.s32.totalorder %s21, 1
      %s289 = scalar_select %p288, %s21, 1
      %p290 = scmp.lt.s32.totalorder %s22, 0
      %s291 = scalar_select %p290, %s22, 0
      %s292 = sadd.s32 %s291, %s289
      %s293 = smul.addr %s292, 8
      %s294 = scalar_lea.vmem %s5, %s293
      %p295 = scmp.lt.s32.totalorder %s21, 1
      %s296 = scalar_select %p295, %s21, 1
      %s297 = smul.addr %s296, 8
      %s298 = scalar_lea.vmem %s0, %s297
      %p299 = scmp.lt.s32.totalorder %s23, 0
      %s300 = scalar_select %p299, %s23, 0
      %s301 = smul.addr %s300, 8
      %s302 = scalar_lea.vmem %s1, %s301
      %p303 = scmp.lt.s32.totalorder %s23, 0
      %s304 = scalar_select %p303, %s23, 0
      %s305 = scalar_lea.vmem %s2, %s304
      %s306 = smul.u32 16, %s23
      %p307 = scmp.lt.s32.totalorder %s306, 15
      %s308 = scalar_select %p307, %s306, 15
      %p309 = scmp.lt.s32.totalorder %s22, 0
      %s310 = scalar_select %p309, %s22, 0
      %s311 = sadd.s32 %s310, %s308
      %s312 = smul.addr %s311, 8
      %s313 = scalar_lea.vmem %s3, %s312
      %s314 = smul.u32 16, %s23
      %p315 = scmp.lt.s32.totalorder %s22, 0
      %s316 = scalar_select %p315, %s22, 0
      %s317 = scalar_lea.vmem %s4, %s316
      %p318 = scmp.lt.s32.totalorder %s21, 1
      %s319 = scalar_select %p318, %s21, 1
      %p320 = scmp.lt.s32.totalorder %s22, 0
      %s321 = scalar_select %p320, %s22, 0
      %s322 = sadd.s32 %s321, %s319
      %s323 = smul.addr %s322, 8
      %s324 = scalar_lea.vmem %s5, %s323
      %v325 = vld [vmem:[%s298] sm:$0xff]
      %v326 = vld [vmem:[%s302] sm:$0xff]
      %v327 = vld [vmem:[%s302 + $0x8] sm:$0xff]
      %v328 = vld [vmem:[%s302 + $0x10] sm:$0xff]
      %v329 = vld [vmem:[%s302 + $0x18] sm:$0xff]
      %v330 = vld [vmem:[%s302 + $0x20] sm:$0xff]
      %v331 = vld [vmem:[%s302 + $0x28] sm:$0xff]
      %v332 = vld [vmem:[%s302 + $0x30] sm:$0xff]
      %v333 = vld [vmem:[%s302 + $0x38] sm:$0xff]
      %v334 = vld [vmem:[%s302 + $0x40] sm:$0xff]
      %v335 = vld [vmem:[%s302 + $0x48] sm:$0xff]
      %v336 = vld [vmem:[%s302 + $0x50] sm:$0xff]
      %v337 = vld [vmem:[%s302 + $0x58] sm:$0xff]
      %v338 = vld [vmem:[%s302 + $0x60] sm:$0xff]
      %v339 = vld [vmem:[%s302 + $0x68] sm:$0xff]
      %v340 = vld [vmem:[%s302 + $0x70] sm:$0xff]
      %v341 = vld [vmem:[%s302 + $0x78] sm:$0xff]
      %v342 = vld [vmem:[%s305] sm:$0x1]
      %v344 = vperm.slane %v342, 0
      %346 = vmatpush.msra.mxu0 %v341
      %347 = vmatpush.msra.mxu0 %v340
      %348 = vmatpush.msra.mxu0 %v339
      %349 = vmatpush.msra.mxu0 %v338
      %350 = vmatpush.msra.mxu0 %v337
      %351 = vmatpush.msra.mxu0 %v336
      %352 = vmatpush.msra.mxu0 %v335
      %353 = vmatpush.msra.mxu0 %v334
      %354 = vmatpush.msra.mxu0 %v333
      %355 = vmatpush.msra.mxu0 %v332
      %356 = vmatpush.msra.mxu0 %v331
      %357 = vmatpush.msra.mxu0 %v330
      %358 = vmatpush.msra.mxu0 %v329
      %359 = vmatpush.msra.mxu0 %v328
      %360 = vmatpush.msra.mxu0 %v327
      %361 = vmatpush.msra.mxu0 %v326
      %362 = vmatmul.f32.gmra.mxu0 %v325
      %v363 = vpop.f32.mrf.mxu0
      %v364 = vadd.f32 %v344, %v363
      %365 = vdwg.mxu0
      %v366 = vmul.f32 %v364, 0.5
      %v367 = vmul.f32 %v364, 0.70710677
      %v368 = vmul.f32 %v367, %v367
      %v369 = vmin.f32 16.0, %v368
      %v370 = vmul.f32 %v369, 2.1237322e-06
      %v371 = vadd.f32 %v370, 0.00028619796
      %v372 = vmul.f32 %v369, %v371
      %v373 = vadd.f32 %v372, 0.0036580483
      %v374 = vmul.f32 %v369, %v373
      %v375 = vadd.f32 %v374, 0.05243302
      %v376 = vmul.f32 %v369, %v375
      %v377 = vadd.f32 %v376, 0.18741608
      %v378 = vmul.f32 %v369, %v377
      %v379 = vadd.f32 %v378, 1.1283791
      %v380 = vmul.f32 %v367, %v379
      %v381 = vmul.f32 %v369, 3.8918573e-05
      %v382 = vadd.f32 %v381, 0.001143296
      %v383 = vmul.f32 %v369, %v382
      %v384 = vadd.f32 %v383, 0.014752088
      %v385 = vmul.f32 %v369, %v384
      %v386 = vadd.f32 %v385, 0.112945676
      %v387 = vmul.f32 %v369, %v386
      %v388 = vadd.f32 %v387, 0.4994258
      %v389 = vmul.f32 %v369, %v388
      %v390 = vadd.f32 %v389, 1.0
      %v391 = vrcp.pop %v390
      %v392 = vmul.f32 %v390, %v391
      %v393 = vsub.f32 1.0, %v392
      %v394 = vmul.f32 %v391, %v393
      %v395 = vadd.f32 %v391, %v394
      %vm396 = vweird.f32 %v390
      %vm397 = vweird.f32 %v391
      %vm398 = vmor %vm396, %vm397
      %v399 = vsel %vm398, %v391, %v395
      %v400 = vand.u32 2147483647, %v390
      %vm401 = vcmp.eq.f32.partialorder %v400, 8.507059e+37
      %v402 = vand.u32 %v390, 2147483648
      %v403 = vor.u32 1.1754944e-38, %v402
      %v404 = vsel %vm401, %v403, %v399
      %v405 = vmul.f32 %v380, %v404
      %v406 = vmin.f32 %v405, 1.0
      %v407 = vmax.f32 %v406, -1.0
      %v408 = vadd.f32 %v407, 1.0
      %v409 = vmul.f32 %v366, %v408
      %v410 = vld [vmem:[%s313] sm:$0xff]
      %v411 = vld [vmem:[%s313 + $0x8] sm:$0xff]
      %v412 = vld [vmem:[%s313 + $0x10] sm:$0xff]
      %v413 = vld [vmem:[%s313 + $0x18] sm:$0xff]
      %v414 = vld [vmem:[%s313 + $0x20] sm:$0xff]
      %v415 = vld [vmem:[%s313 + $0x28] sm:$0xff]
      %v416 = vld [vmem:[%s313 + $0x30] sm:$0xff]
      %v417 = vld [vmem:[%s313 + $0x38] sm:$0xff]
      %v418 = vld [vmem:[%s313 + $0x40] sm:$0xff]
      %v419 = vld [vmem:[%s313 + $0x48] sm:$0xff]
      %v420 = vld [vmem:[%s313 + $0x50] sm:$0xff]
      %v421 = vld [vmem:[%s313 + $0x58] sm:$0xff]
      %v422 = vld [vmem:[%s313 + $0x60] sm:$0xff]
      %v423 = vld [vmem:[%s313 + $0x68] sm:$0xff]
      %v424 = vld [vmem:[%s313 + $0x70] sm:$0xff]
      %v425 = vld [vmem:[%s313 + $0x78] sm:$0xff]
      %v426 = vld [vmem:[%s317] sm:$0x1]
      %v428 = vperm.slane %v426, 0
      %430 = vmatpush.msra.mxu0 %v425
      %431 = vmatpush.msra.mxu0 %v424
      %432 = vmatpush.msra.mxu0 %v423
      %433 = vmatpush.msra.mxu0 %v422
      %434 = vmatpush.msra.mxu0 %v421
      %435 = vmatpush.msra.mxu0 %v420
      %436 = vmatpush.msra.mxu0 %v419
      %437 = vmatpush.msra.mxu0 %v418
      %438 = vmatpush.msra.mxu0 %v417
      %439 = vmatpush.msra.mxu0 %v416
      %440 = vmatpush.msra.mxu0 %v415
      %441 = vmatpush.msra.mxu0 %v414
      %442 = vmatpush.msra.mxu0 %v413
      %443 = vmatpush.msra.mxu0 %v412
      %444 = vmatpush.msra.mxu0 %v411
      %445 = vmatpush.msra.mxu0 %v410
      %446 = vmatmul.f32.gmra.mxu0 %v409
      %v447 = vpop.f32.mrf.mxu0
      %v448 = vadd.f32 %v428, %v447
      %449 = vdwg.mxu0
      %450 = vst [vmem:[%s324] sm:$0xff] %v448
      %p451 = scmp.lt.s32.totalorder %s21, 1
      %s452 = scalar_select %p451, %s21, 1
      %p453 = scmp.lt.s32.totalorder %s22, 0
      %s454 = scalar_select %p453, %s22, 0
      %s455 = sadd.s32 %s454, %s452
      %s456 = smul.addr %s455, 8
      %s457 = scalar_lea.vmem %s5, %s456
      // Predicated region
      $region41: #{_samlp_forward_jit.1} parent=39 // pred_check
        %p458 = pneg %p187
      $region42: #{_samlp_forward_jit.1} parent=39 // pred_check_branch
        %460 = sbr.rel (%p458) target = $region44
      $region43: #{_samlp_forward_jit.1} parent=39 // pred_region
        _
      $region44: #{_samlp_forward_jit.1} parent=39 // pred_fallthru
        _
    $region40: #{_samlp_forward_jit.1} parent=5 // pred_fallthru
      _
    %p461 = scmp.le.s32.totalorder 2, %s11
    // Predicated region
    $region45: #{_samlp_forward_jit.1} parent=5 // pred_check
      %p462 = pneg %p461
    $region46: #{_samlp_forward_jit.1} parent=5 // pred_check_branch
      %464 = sbr.rel (%p462) target = $region48
    $region47: #{_samlp_forward_jit.1} parent=5 // pred_region
      %s465 = ssub.s32 %s11, 2
      // Predicated region
      $region49: #{_samlp_forward_jit.1} parent=47 // pred_check
        %p466 = pneg %p193
      $region50: #{_samlp_forward_jit.1} parent=47 // pred_check_branch
        %468 = sbr.rel (%p466) target = $region52
      $region51: #{_samlp_forward_jit.1} parent=47 // pred_region
        %p469 = scmp.lt.s32.totalorder %s24, 1
        %s470 = scalar_select %p469, %s24, 1
        %p471 = scmp.lt.s32.totalorder %s25, 0
        %s472 = scalar_select %p471, %s25, 0
        %s473 = sadd.s32 %s472, %s470
        %s474 = smul.addr %s473, 8
        %s475 = scalar_lea.vmem %s5, %s474
      $region52: #{_samlp_forward_jit.1} parent=47 // pred_fallthru
        _
    $region48: #{_samlp_forward_jit.1} parent=5 // pred_fallthru
      _
  $region6: #{_samlp_forward_jit.1} parent=0 // loop_footer
    %s15 = sadd.s32 1, %s11
  $region7: #{_samlp_forward_jit.1} parent=0 // loop_footer_branch
    %10 = sbr.rel target = $region3
  $region8: #{_samlp_forward_jit.1} parent=0 // loop_exit
    _

</llo_original>
